<compile_context>
chip_gen: v5e
topology: v5e:2x2
jax: 0.10.0
libtpu: 0.0.40
codegen_flags: <defaults>
</compile_context>

<pallas_src>
import jax
import jax.numpy as jnp
from jax.experimental import pallas as pl
from jax.experimental.pallas import tpu as pltpu

LANES = 128
SUBLANES = 8
MAX_TILE_ROWS = 2048  # (2048, 128) f32 block = 1 MiB per buffer


def _mean_kernel(cnt_ref, x_ref, o_ref, acc_ref):
    """cnt_ref: SMEM int32[2] = [n_valid_elements, n_valid_rows]."""
    i = pl.program_id(0)

    @pl.when(i == 0)
    def _():
        acc_ref[...] = jnp.zeros_like(acc_ref)

    tile_rows = x_ref.shape[0]
    # Mask rows that lie past the end of the slab (a partial last tile reads
    # unspecified data). Rows inside the slab that came from the small zero
    # pad contribute 0 to the sum and need no mask.
    row = jax.lax.broadcasted_iota(jnp.int32, (tile_rows, LANES), 0)
    valid = (i * tile_rows + row) < cnt_ref[1]
    xv = jnp.where(valid, x_ref[...].astype(jnp.float32), 0.0)

    # Pure-VPU partial reduction: fold groups of 8 rows into the (8, 128)
    # vector accumulator (element-wise vreg adds; no XLU in the hot loop).
    acc_ref[...] += xv.reshape(-1, SUBLANES, LANES).sum(axis=0)

    @pl.when(i == pl.num_programs(0) - 1)
    def _():
        total = jnp.sum(acc_ref[...])  # one XLU reduce for the whole kernel
        o_ref[0, 0] = total / cnt_ref[0].astype(jnp.float32)


def average_reward(x):
    """Pallas equivalent of `torch.mean(x)` (averageReward.forward)."""
    n_valid = x.size
    flat = x.reshape(-1)  # free metadata reshape, keeps native dtype

    chunk = SUBLANES * LANES  # 1024
    if n_valid % chunk != 0:
        # Minimal zero-pad so the slab holds a whole number of 8x128 vregs.
        # Zeros do not bias the sum; the mean divides by the true n_valid.
        # TODO(synk): handle the ragged <1024-element tail fully in-kernel to
        # avoid even this (small-input / unaligned-size only) copy.
        flat = jnp.pad(flat, (0, chunk - n_valid % chunk))

    rows = flat.size // LANES
    x2d = flat.reshape(rows, LANES)  # lane-dense slab, native dtype

    tile_rows = min(MAX_TILE_ROWS, rows)  # both are multiples of 8
    num_tiles = pl.cdiv(rows, tile_rows)

    counts = jnp.array([n_valid, rows], dtype=jnp.int32)

    out = pl.pallas_call(
        _mean_kernel,
        out_shape=jax.ShapeDtypeStruct((1, 1), jnp.float32),
        grid_spec=pltpu.PrefetchScalarGridSpec(
            num_scalar_prefetch=1,
            grid=(num_tiles,),
            in_specs=[pl.BlockSpec((tile_rows, LANES), lambda i, cnt: (i, 0))],
            out_specs=pl.BlockSpec(
                (1, 1), lambda i, cnt: (0, 0), memory_space=pltpu.SMEM
            ),
            scratch_shapes=[pltpu.VMEM((SUBLANES, LANES), jnp.float32)],
        ),
        compiler_params=pltpu.CompilerParams(
            dimension_semantics=("arbitrary",)
        ),
    )(counts, x2d)

    return out[0, 0]  # scalar, like torch.mean


if __name__ == "__main__":
    key = jax.random.PRNGKey(0)
    # Small NCHW input consistent with a conv-style agent observation.
    x = jax.random.normal(key, (2, 4, 16, 16), dtype=jnp.float32)

    loss = average_reward(x)
    jax.block_until_ready(loss)
    ref = jnp.mean(x)
    assert jnp.allclose(loss, ref, atol=1e-5, rtol=1e-5), (loss, ref)

    # Extra coverage: unaligned size (pad path) and multi-tile + masked tail.
    for shape in [(3, 5, 7, 9), (4, 16, 72, 64)]:
        key, sub = jax.random.split(key)
        y = jax.random.normal(sub, shape, dtype=jnp.float32)
        got = average_reward(y)
        jax.block_until_ready(got)
        want = jnp.mean(y)
        assert jnp.allclose(got, want, atol=1e-4, rtol=1e-4), (shape, got, want)

    print("KERNEL_OK")
</pallas_src>

<mosaic_0001>
module attributes {stable_mosaic.version = 11 : i64} {
  func.func @_mean_kernel(%arg0: i32, %arg1: memref<2xi32, #tpu.memory_space<smem>>, %arg2: memref<16x128xf32, #tpu.memory_space<vmem>>, %arg3: memref<1x1xf32, #tpu.memory_space<smem>>, %arg4: memref<8x128xf32, #tpu.memory_space<vmem>>) attributes {dimension_semantics = [#tpu.dimension_semantics<arbitrary>], iteration_bounds = array<i64: 1>, scalar_prefetch = 1 : i64, scratch_operands = 1 : i64, tpu.core_type = #tpu.core_type<tc>, window_params = [{transform_indices = @transform_0, window_bounds = array<i64: 16, 128>}, {transform_indices = @transform_1, window_bounds = array<i64: 1, 1>}]} {
    %c0_i32 = arith.constant 0 : i32
    %0 = arith.cmpi eq, %arg0, %c0_i32 : i32
    %1 = arith.extui %0 : i1 to i32
    %c0_i32_0 = arith.constant 0 : i32
    %2 = arith.cmpi ne, %1, %c0_i32_0 : i32
    scf.if %2 {
      %cst_9 = arith.constant 0.000000e+00 : f32
      %21 = vector.broadcast %cst_9 : f32 to vector<8x128xf32>
      %c0_10 = arith.constant 0 : index
      %c0_11 = arith.constant 0 : index
      %22 = vector.load %arg4[%c0_10, %c0_11] : memref<8x128xf32, #tpu.memory_space<vmem>>, vector<8x128xf32>
      tpu.vector_store %arg4[%c0_10, %c0_11], %21 {strides = array<i32>} : memref<8x128xf32, #tpu.memory_space<vmem>>, vector<8x128xf32>,
    } else {
    }
    %3 = tpu.iota {dimensions = array<i32: 0>} : vector<16x128xi32>
    %c16_i32 = arith.constant 16 : i32
    %4 = arith.muli %arg0, %c16_i32 : i32
    %5 = vector.broadcast %4 : i32 to vector<16x128xi32>
    %6 = arith.addi %5, %3 : vector<16x128xi32>
    %c1 = arith.constant 1 : index
    %7 = memref.load %arg1[%c1] : memref<2xi32, #tpu.memory_space<smem>>
    %8 = vector.broadcast %7 : i32 to vector<16x128xi32>
    %9 = arith.cmpi slt, %6, %8 : vector<16x128xi32>
    %c0 = arith.constant 0 : index
    %c0_1 = arith.constant 0 : index
    %10 = vector.load %arg2[%c0, %c0_1] : memref<16x128xf32, #tpu.memory_space<vmem>>, vector<16x128xf32>
    %cst = arith.constant 0.000000e+00 : f32
    %11 = vector.broadcast %cst : f32 to vector<16x128xf32>
    %12 = arith.select %9, %10, %11 : vector<16x128xi1>, vector<16x128xf32>
    %c0_2 = arith.constant 0 : index
    %c0_3 = arith.constant 0 : index
    %13 = vector.load %arg4[%c0_2, %c0_3] : memref<8x128xf32, #tpu.memory_space<vmem>>, vector<8x128xf32>
    %14 = vector.shape_cast %12 : vector<16x128xf32> to vector<2x8x128xf32>
    %cst_4 = arith.constant dense<0.000000e+00> : vector<8x128xf32>
    %15 = vector.multi_reduction <add>, %14, %cst_4 [0] : vector<2x8x128xf32> to vector<8x128xf32>
    %16 = arith.addf %13, %15 : vector<8x128xf32>
    %c0_5 = arith.constant 0 : index
    %c0_6 = arith.constant 0 : index
    %17 = vector.load %arg4[%c0_5, %c0_6] : memref<8x128xf32, #tpu.memory_space<vmem>>, vector<8x128xf32>
    tpu.vector_store %arg4[%c0_5, %c0_6], %16 {strides = array<i32>} : memref<8x128xf32, #tpu.memory_space<vmem>>, vector<8x128xf32>,
    %c0_i32_7 = arith.constant 0 : i32
    %18 = arith.cmpi eq, %arg0, %c0_i32_7 : i32
    %19 = arith.extui %18 : i1 to i32
    %c0_i32_8 = arith.constant 0 : i32
    %20 = arith.cmpi ne, %19, %c0_i32_8 : i32
    scf.if %20 {
      %c0_9 = arith.constant 0 : index
      %c0_10 = arith.constant 0 : index
      %21 = vector.load %arg4[%c0_9, %c0_10] : memref<8x128xf32, #tpu.memory_space<vmem>>, vector<8x128xf32>
      %22 = vector.shape_cast %21 : vector<8x128xf32> to vector<1x8x128xf32>
      %cst_11 = arith.constant dense<0.000000e+00> : vector<1xf32>
      %23 = vector.multi_reduction <add>, %22, %cst_11 [1, 2] : vector<1x8x128xf32> to vector<1xf32>
      %24 = vector.shape_cast %23 : vector<1xf32> to vector<1x1x1xf32>
      %25 = vector.extract %24[0, 0, 0] : f32 from vector<1x1x1xf32>
      %c0_12 = arith.constant 0 : index
      %26 = memref.load %arg1[%c0_12] : memref<2xi32, #tpu.memory_space<smem>>
      %27 = arith.sitofp %26 : i32 to f32
      %28 = arith.divf %25, %27 : f32
      %c0_13 = arith.constant 0 : index
      %c0_14 = arith.constant 0 : index
      %29 = memref.load %arg3[%c0_13, %c0_14] : memref<1x1xf32, #tpu.memory_space<smem>>
      memref.store %28, %arg3[%c0_13, %c0_14] : memref<1x1xf32, #tpu.memory_space<smem>>
    } else {
    }
    return
  }
  func.func @transform_0(%arg0: i32, %arg1: memref<2xi32, #tpu.memory_space<smem>>) -> (i32, i32) {
    %c0_i32 = arith.constant 0 : i32
    %c0_i32_0 = arith.constant 0 : i32
    return %arg0, %c0_i32 : i32, i32
  }
  func.func @transform_1(%arg0: i32, %arg1: memref<2xi32, #tpu.memory_space<smem>>) -> (i32, i32) {
    %c0_i32 = arith.constant 0 : i32
    %c0_i32_0 = arith.constant 0 : i32
    %c0_i32_1 = arith.constant 0 : i32
    return %c0_i32, %c0_i32_0 : i32, i32
  }
}

</mosaic_0001>

<llo_original>
// kernel: tpu_custom_call.1
$region0: #{tpu_custom_call.1}
  #allocation0 [shape = 'u32[]', space=smem, size = 0x4, offset = 0x4, fixed_abs, tag = 'smem constant byte address 0x4 - core index']
  #allocation1 [shape = 'u32[72,128]{1,0:T(1,128)}', space=vmem, size = 0x9000, scoped, tag = 'internal scratch']
  #allocation2 [shape = 'f32[8,128]{1,0:T(8,128)}', space=vmem, size = 0x1000, scoped, tag = 'scratch operand']
  #allocation3 [shape = 's32[1]{0}', space=sflag, size = 0x4, scoped, tag = 'scoped memory for tpu_custom_call.1']
  #allocation4 [shape = 'u8[512]{0}', space=smem, size = 0x200, scoped, tag = 'prefetched SMEM operand 0']
  %s0 = inlined_call_operand.hbm [shape: s32[2], index: 0, kind: input, shape index: {}]
  %s1 = inlined_call_operand.hbm [shape: f32[16,128], index: 1, kind: input, shape index: {}]
  %s2 = inlined_call_operand.hbm [shape: f32[1,1], index: 2, kind: output, shape index: {}]
  %s3 = sld [smem:[#allocation0]]
  $region26: #{tpu_custom_call.1} parent=0
    _
  %s5 = ssub.s32 1, %s3
  %s6 = scalar_select 0, %s5, %s3
  %s8 = sshll.u32 %s0, 4
  %s9 = int_to_ptr.hbm [resolvable:$true] %s8
  %11 = dma.hbm_to_smem %s9, 16, [#allocation4], [#allocation3]
  %13 = dma.done [#allocation3], 16
  %14 = sfence
  $region1: #{tpu_custom_call.1} parent=0
    #allocation5 [shape = 'u8[8192]{0}', space=vmem, size = 0x2000, scoped, tag = 'input window, operand 1, single buffered']
    #allocation6 [shape = 's32[1]{0}', space=sflag, size = 0x4, scoped, tag = 'scoped memory for tpu_custom_call.1']
    #allocation7 [shape = 's32[1]{0}', space=sflag, size = 0x4, scoped, tag = 'scoped memory for tpu_custom_call.1']
    #allocation8 [shape = 'u8[512]{0}', space=smem, size = 0x200, scoped, tag = 'output window, operand 0, single buffered']
    %15 = vsyncpa [#allocation6], 0
    %16 = vsyncpa [#allocation7], 0
    // Predicated region
    $region2: #{tpu_custom_call.1} parent=1 // pred_check
      _
    $region3: #{tpu_custom_call.1} parent=1 // pred_check_branch
      %18 = sbr.rel (0) target = $region5
    $region4: #{tpu_custom_call.1} parent=1 // pred_region
      %20 = vsyncadd [#allocation6], 0
      %s21 = sshll.u32 %s1, 4
      %s22 = int_to_ptr.hbm [resolvable:$true] %s21
      %s23 = sshll.u32 [#allocation5], 4
      %s24 = int_to_ptr.vmem [resolvable:$true] %s23
      %29 = dma.hbm_to_vmem [thread:$0]  %s22, 256, %s24, [#allocation6], 128, 128, 8
    $region5: #{tpu_custom_call.1} parent=1 // pred_fallthru
      _
    // Predicated region
    $region6: #{tpu_custom_call.1} parent=1 // pred_check
      _
    $region7: #{tpu_custom_call.1} parent=1 // pred_check_branch
      %31 = sbr.rel (0) target = $region9
    $region8: #{tpu_custom_call.1} parent=1 // pred_region
      %33 = dma.done [#allocation6], 256
    $region9: #{tpu_custom_call.1} parent=1 // pred_fallthru
      _
    %p34 = scmp.eq.s32.totalorder 0, 0
    // Predicated region
    $region10: #{tpu_custom_call.1} parent=1 // pred_check
      %p35 = pneg %p34
    $region11: #{tpu_custom_call.1} parent=1 // pred_check_branch
      %37 = sbr.rel (%p35) target = $region13
    $region12: #{tpu_custom_call.1} parent=1 // pred_region
      %38 = vst [vmem:[#allocation2] sm:$0xff] 0.0
    $region13: #{tpu_custom_call.1} parent=1 // pred_fallthru
      _
    %v39 = vlaneseq
    %v40 = vshrl.u32 %v39, 7
    %v41 = vadd.s32 %v40, 8
    %s42 = smul.u32 0, 16
    %v43 = vstv %s42
    %v44 = vadd.s32 %v43, %v40
    %v45 = vadd.s32 %v43, %v41
    %s46 = sld [smem:[#allocation4 + $0x1]]
    %v47 = vstv %s46
    %vm48 = vcmp.lt.s32.totalorder %v44, %v47
    %vm49 = vcmp.lt.s32.totalorder %v45, %v47
    %v50 = vld [vmem:[#allocation5] sm:$0xff]
    %v51 = vld [vmem:[#allocation5 + $0x8] sm:$0xff]
    %v52 = vsel %vm48, %v50, 0.0
    %v53 = vsel %vm49, %v51, 0.0
    %v54 = vld [vmem:[#allocation2] sm:$0xff]
    %v55 = vadd.f32 %v52, %v53
    %v56 = vadd.f32 %v54, %v55
    %57 = vst [vmem:[#allocation2] sm:$0xff] %v56
    // Predicated region
    $region14: #{tpu_custom_call.1} parent=1 // pred_check
      %p58 = pneg %p34
    $region15: #{tpu_custom_call.1} parent=1 // pred_check_branch
      %60 = sbr.rel (%p58) target = $region17
    $region16: #{tpu_custom_call.1} parent=1 // pred_region
      %v61 = vld [vmem:[#allocation2] sm:$0xff]
      %62 = vadd.xlane.f32.xlu0 %v61
      %v63 = vpop.xlane.xlu0 %62
      %v64 = vrot.slane %v63, 4
      %v65 = vadd.f32 %v63, %v64
      %v66 = vrot.slane %v65, 2
      %v67 = vadd.f32 %v65, %v66
      %v68 = vrot.slane %v67, 1
      %v69 = vadd.f32 %v67, %v68
      %s70 = vtos %v69
      %s71 = sld [smem:[#allocation4]]
      %s72 = scvt.s32.f32 %s71
      %v73 = vstv %s72
      %v74 = vrcp.pop %v73
      %v75 = vmul.f32 %v73, %v74
      %v76 = vsub.f32 1.0, %v75
      %v77 = vmul.f32 %v74, %v76
      %v78 = vadd.f32 %v74, %v77
      %vm79 = vweird.f32 %v73
      %vm80 = vweird.f32 %v74
      %vm81 = vmor %vm79, %vm80
      %v82 = vsel %vm81, %v74, %v78
      %v83 = vand.u32 2147483647, %v73
      %vm84 = vcmp.eq.f32.partialorder %v83, 8.507059e+37
      %v85 = vand.u32 %v73, 2147483648
      %v86 = vor.u32 1.1754944e-38, %v85
      %v87 = vsel %vm84, %v86, %v82
      %s88 = vtos %v87
      %s89 = smul.f32 %s70, %s88
      %s90 = scalar_lea.smem [#allocation8], 0
      %91 = sst [smem:[%s90]] %s89
    $region17: #{tpu_custom_call.1} parent=1 // pred_fallthru
      _
    // Predicated region
    $region18: #{tpu_custom_call.1} parent=1 // pred_check
      _
    $region19: #{tpu_custom_call.1} parent=1 // pred_check_branch
      %93 = sbr.rel (0) target = $region21
    $region20: #{tpu_custom_call.1} parent=1 // pred_region
      %95 = vsyncadd [#allocation7], 0
      %s97 = sshll.u32 %s2, 4
      %s98 = int_to_ptr.hbm [resolvable:$true] %s97
      %100 = dma.smem_to_hbm [#allocation8], 16, %s98, [#allocation7]
    $region21: #{tpu_custom_call.1} parent=1 // pred_fallthru
      _
    // Predicated region
    $region22: #{tpu_custom_call.1} parent=1 // pred_check
      _
    $region23: #{tpu_custom_call.1} parent=1 // pred_check_branch
      %102 = sbr.rel (0) target = $region25
    $region24: #{tpu_custom_call.1} parent=1 // pred_region
      %104 = dma.done [#allocation7], 16
    $region25: #{tpu_custom_call.1} parent=1 // pred_fallthru
      _
    %105 = sfence
    %106 = vsyncpa [#allocation6], 1
    %107 = vsyncpa [#allocation7], 1

</llo_original>
